<compile_context>
chip_gen: v7x
topology: tpu7x:2x2x1
jax: 0.10.0
libtpu: 0.0.40
codegen_flags: <defaults>
</compile_context>

<pallas_src>
import math

import jax
import jax.numpy as jnp
from jax.experimental import pallas as pl
from jax.experimental.pallas import tpu as pltpu


def _indep_linear_kernel(x_ref, w_ref, o_ref):
    # Elementwise multiply; the (1, tile_cols) weight row broadcasts over rows.
    # Explicit cast in case dtype promotion (e.g. bf16 x * f32 w) widens it.
    o_ref[...] = (x_ref[...] * w_ref[...]).astype(o_ref.dtype)


def _sublane_min(dtype) -> int:
    # 8 rows for 32-bit, 16 for bf16/f16, 32 for int8/fp8.
    itemsize = jnp.dtype(dtype).itemsize
    return max(8, 32 // max(itemsize, 1))


_MAX_TILE_COLS = 2048                 # lane-dense cap for the column tile
_SMALL_PROBLEM_BYTES = 1 << 20        # below this, plain XLA elementwise is faster
_SPLIT_MIN_BYTES = 2 * 1024 * 1024    # only force a >=2-block grid above this


def _tpu_generation() -> int:
    """Best-effort TPU generation detection (0 if unknown)."""
    try:
        kind = jax.devices()[0].device_kind.lower()
    except Exception:
        return 0
    for gen in (7, 6, 5, 4):
        if f"v{gen}" in kind or (gen == 7 and "7x" in kind):
            return gen
    return 0


def _gen_params(gen: int):
    """(target x-tile bytes, vmem_limit_bytes, want_multi_block) per generation."""
    if gen in (5, 6):
        # 128 MiB physical VMEM: 8 MiB x tiles -> ~32 MiB resident, 64 MiB limit.
        return 8 * 1024 * 1024, 64 * 1024 * 1024, False
    # v7x (64 MiB physical, 2 TCs) and unknown chips: conservative + multi-block.
    return 6 * 1024 * 1024, 44 * 1024 * 1024, True


def _round_rows(tr: int, b: int, sub_min: int) -> int:
    tr = min(tr, b)
    if tr < b:
        tr = max(sub_min, (tr // sub_min) * sub_min)
    return tr


def _round_cols(tc: int, d: int) -> int:
    tc = min(tc, d)
    if tc < d:
        tc = max(128, (tc // 128) * 128)
    return tc


def _choose_tiles(B, D, x_dtype, out_dtype, target_tile_bytes, want_two_blocks):
    x_item = jnp.dtype(x_dtype).itemsize
    out_item = jnp.dtype(out_dtype).itemsize
    item = max(x_item, out_item)
    sub_min = max(_sublane_min(x_dtype), _sublane_min(out_dtype))

    # Column tile: full D if small, otherwise a lane-dense multiple of 128.
    tile_cols = D if D <= _MAX_TILE_COLS else _MAX_TILE_COLS
    if tile_cols < D:
        tile_cols = max(128, (tile_cols // 128) * 128)

    # Row tile: fill the per-tile byte budget, multiple of the sublane minimum.
    rows_budget = max(sub_min, target_tile_bytes // max(tile_cols * item, 1))
    tile_rows = min(B, rows_budget)
    if tile_rows < B:
        tile_rows = max(sub_min, (tile_rows // sub_min) * sub_min)

    # v7x: make sure >=2 blocks exist along a parallel axis so both TCs work.
    n_col_blocks = pl.cdiv(D, tile_cols)
    total_bytes = B * D * item
    if (want_two_blocks and n_col_blocks == 1 and tile_rows >= B
            and B >= 2 * sub_min and total_bytes >= _SPLIT_MIN_BYTES):
        half = -(-B // 2)  # ceil(B/2)
        tile_rows = max(sub_min, (half // sub_min) * sub_min)

    return tile_rows, tile_cols


def independent_linear_no_intercept(x, weights, *, tile_rows=None, tile_cols=None,
                                    force_pallas=False):
    """Computes x * weights (weights broadcast over the last axis of x).

    x: (..., D) array, weights: (D,) array.
    """
    D = x.shape[-1]
    assert weights.shape == (D,), f"weights must be ({D},), got {weights.shape}"

    # Matches PyTorch promotion semantics (x * self.weights).
    out_dtype = jnp.result_type(x.dtype, weights.dtype)
    orig_shape = x.shape
    total = int(x.size)

    # Small-problem fallback: a handful of vregs cannot amortize kernel launch
    # + pipeline overhead on any TPU generation.
    if (not force_pallas
            and total * jnp.dtype(out_dtype).itemsize < _SMALL_PROBLEM_BYTES):
        return (x * weights).astype(out_dtype).reshape(orig_shape)

    # Lane-dense reshape for small D (< 128): present a slab whose last dim is
    # a multiple of 128 and tile the weights to match, avoiding masked stores.
    w_row = weights
    if 0 < D < 128:
        L = math.lcm(D, 128)
        if total > 0 and total % L == 0:
            x2d = x.reshape(total // L, L)
            w_row = jnp.tile(weights, L // D)
            Dk = L
        else:
            x2d = x.reshape(-1, D)
            Dk = D
    else:
        x2d = x.reshape(-1, D)
        Dk = D
    B = x2d.shape[0]

    gen = _tpu_generation()
    target_bytes, vmem_limit, want_two = _gen_params(gen)

    auto_rows, auto_cols = _choose_tiles(B, Dk, x.dtype, out_dtype,
                                         target_bytes, want_two)
    sub_min = max(_sublane_min(x.dtype), _sublane_min(out_dtype))
    tr = _round_rows(tile_rows, B, sub_min) if tile_rows is not None else auto_rows
    tc = _round_cols(tile_cols, Dk) if tile_cols is not None else auto_cols

    w2d = w_row.reshape(1, Dk)

    # Grid: cols OUTER, rows INNER -> the weight block index (0, j) only changes
    # when the column block changes, so the weight row is re-DMA'd once per
    # column block, never per row step.
    grid = (pl.cdiv(Dk, tc), pl.cdiv(B, tr))

    out2d = pl.pallas_call(
        _indep_linear_kernel,
        out_shape=jax.ShapeDtypeStruct((B, Dk), out_dtype),
        grid_spec=pltpu.PrefetchScalarGridSpec(
            num_scalar_prefetch=0,
            grid=grid,
            in_specs=[
                pl.BlockSpec((tr, tc), lambda j, i: (i, j)),   # x tile
                pl.BlockSpec((1, tc), lambda j, i: (0, j)),    # resident weight row
            ],
            out_specs=pl.BlockSpec((tr, tc), lambda j, i: (i, j)),
        ),
        compiler_params=pltpu.CompilerParams(
            dimension_semantics=("parallel", "parallel"),
            vmem_limit_bytes=vmem_limit,
        ),
    )(x2d, w2d)

    return out2d.reshape(orig_shape)


if __name__ == "__main__":
    key = jax.random.PRNGKey(0)
    k1, k2, k3 = jax.random.split(key, 3)

    # Case 1: (batch=32, input_dim=256), unit weights — matches
    # nn.Parameter(torch.ones(input_dim)) init. Auto tiles, forced Pallas path.
    B, D = 32, 256
    x = jax.random.normal(k1, (B, D), dtype=jnp.float32)
    w = jnp.ones((D,), dtype=jnp.float32)
    ref = x * w
    out = independent_linear_no_intercept(x, w, force_pallas=True)
    out = jax.block_until_ready(out)
    assert out.shape == (B, D)
    assert jnp.allclose(out, ref, atol=1e-6), "mismatch vs reference (auto tiles)"

    # Case 2: explicit small tiles — exercises the 2-D grid (cols outer, rows
    # inner) and the resident-weight index map.
    out_tiled = independent_linear_no_intercept(
        x, w, tile_rows=8, tile_cols=128, force_pallas=True)
    out_tiled = jax.block_until_ready(out_tiled)
    assert jnp.allclose(out_tiled, ref, atol=1e-6), "mismatch vs reference (tiled grid)"

    # Case 3: small input_dim (D=64 < 128) — exercises the lane-dense reshape
    # path with non-trivial weights.
    B3, D3 = 16, 64
    x3 = jax.random.normal(k2, (B3, D3), dtype=jnp.float32)
    w3 = jax.random.normal(k3, (D3,), dtype=jnp.float32)
    ref3 = x3 * w3
    out3 = independent_linear_no_intercept(x3, w3, force_pallas=True)
    out3 = jax.block_until_ready(out3)
    assert out3.shape == (B3, D3)
    assert jnp.allclose(out3, ref3, atol=1e-6), "mismatch vs reference (lane-dense D<128)"

    print("KERNEL_OK")
</pallas_src>

<mosaic_0001>
module attributes {stable_mosaic.version = 11 : i64} {
  func.func @_indep_linear_kernel(%arg0: i32, %arg1: i32, %arg2: memref<32x256xf32, #tpu.memory_space<vmem>>, %arg3: memref<1x256xf32, #tpu.memory_space<vmem>>, %arg4: memref<32x256xf32, #tpu.memory_space<vmem>>) attributes {dimension_semantics = [#tpu.dimension_semantics<parallel>, #tpu.dimension_semantics<parallel>], iteration_bounds = array<i64: 1, 1>, scalar_prefetch = 0 : i64, scratch_operands = 0 : i64, tpu.core_type = #tpu.core_type<tc>, window_params = [{transform_indices = @transform_0, window_bounds = array<i64: 32, 256>}, {transform_indices = @transform_1, window_bounds = array<i64: 1, 256>}, {transform_indices = @transform_2, window_bounds = array<i64: 32, 256>}]} {
    %c0 = arith.constant 0 : index
    %c0_0 = arith.constant 0 : index
    %0 = vector.load %arg2[%c0, %c0_0] : memref<32x256xf32, #tpu.memory_space<vmem>>, vector<32x256xf32>
    %c0_1 = arith.constant 0 : index
    %c0_2 = arith.constant 0 : index
    %1 = vector.load %arg3[%c0_1, %c0_2] : memref<1x256xf32, #tpu.memory_space<vmem>>, vector<1x256xf32>
    %2 = vector.broadcast %1 : vector<1x256xf32> to vector<32x256xf32>
    %3 = arith.mulf %0, %2 : vector<32x256xf32>
    %c0_3 = arith.constant 0 : index
    %c0_4 = arith.constant 0 : index
    %4 = vector.load %arg4[%c0_3, %c0_4] : memref<32x256xf32, #tpu.memory_space<vmem>>, vector<32x256xf32>
    tpu.vector_store %arg4[%c0_3, %c0_4], %3 {strides = array<i32>} : memref<32x256xf32, #tpu.memory_space<vmem>>, vector<32x256xf32>,
    return
  }
  func.func @transform_0(%arg0: i32, %arg1: i32) -> (i32, i32) {
    %c0_i32 = arith.constant 0 : i32
    return %arg1, %arg0 : i32, i32
  }
  func.func @transform_1(%arg0: i32, %arg1: i32) -> (i32, i32) {
    %c0_i32 = arith.constant 0 : i32
    %c0_i32_0 = arith.constant 0 : i32
    return %c0_i32, %arg0 : i32, i32
  }
  func.func @transform_2(%arg0: i32, %arg1: i32) -> (i32, i32) {
    %c0_i32 = arith.constant 0 : i32
    return %arg1, %arg0 : i32, i32
  }
}

</mosaic_0001>

<llo_original>
// kernel: tpu_custom_call.1
$region0: #{tpu_custom_call.1}
  #allocation0 [shape = 'u32[]', space=smem, size = 0x4, offset = 0x4, fixed_abs, tag = 'smem constant byte address 0x4 - core index']
  #allocation1 [shape = 'u32[144,128]{1,0:T(1,128)}', space=vmem, size = 0x12000, scoped, tag = 'internal scratch']
  %s0 = inlined_call_operand.hbm [shape: f32[32,256], index: 0, kind: input, shape index: {}]
  %s1 = inlined_call_operand.vmem [shape: f32[1,256], index: 1, kind: input, shape index: {}]
  %s2 = inlined_call_operand.hbm [shape: f32[32,256], index: 2, kind: output, shape index: {}]
  %s3 = sld [smem:[#allocation0]]
  $region22: #{tpu_custom_call.1} parent=0
    _
  %s5 = ssub.s32 1, %s3
  %s6 = scalar_select 0, %s5, %s3
  $region1: #{tpu_custom_call.1} parent=0
    #allocation2 [shape = 'u8[32768]{0}', space=vmem, size = 0x8000, scoped, tag = 'input window, operand 0, single buffered']
    #allocation3 [shape = 's32[1]{0}', space=sflag, size = 0x4, scoped, tag = 'scoped memory for tpu_custom_call.1']
    #allocation4 [shape = 's32[1]{0}', space=sflag, size = 0x4, scoped, tag = 'scoped memory for tpu_custom_call.1']
    #allocation5 [shape = 'u8[32768]{0}', space=vmem, size = 0x8000, scoped, tag = 'output window, operand 0, single buffered']
    %7 = vsyncpa [#allocation3], 0
    %8 = vsyncpa [#allocation4], 0
    // Predicated region
    $region2: #{tpu_custom_call.1} parent=1 // pred_check
      _
    $region3: #{tpu_custom_call.1} parent=1 // pred_check_branch
      %10 = sbr.rel (0) target = $region5
    $region4: #{tpu_custom_call.1} parent=1 // pred_region
      %s12 = ssub.s32 1024, 1024
      %13 = vsyncadd [#allocation3], %s12
      %s14 = sshll.u32 [#allocation2], 4
      %s15 = int_to_ptr.vmem [resolvable:$true] %s14
      %20 = dma.hbm_to_vmem [thread:$0]  %s0, 1024, %s15, [#allocation3], 256, 256, 16
    $region5: #{tpu_custom_call.1} parent=1 // pred_fallthru
      _
    // Predicated region
    $region6: #{tpu_custom_call.1} parent=1 // pred_check
      _
    $region7: #{tpu_custom_call.1} parent=1 // pred_check_branch
      %22 = sbr.rel (0) target = $region9
    $region8: #{tpu_custom_call.1} parent=1 // pred_region
      _
    $region9: #{tpu_custom_call.1} parent=1 // pred_fallthru
      _
    // Predicated region
    $region10: #{tpu_custom_call.1} parent=1 // pred_check
      _
    $region11: #{tpu_custom_call.1} parent=1 // pred_check_branch
      %24 = sbr.rel (0) target = $region13
    $region12: #{tpu_custom_call.1} parent=1 // pred_region
      %25 = dma.done [#allocation3], 1024
    $region13: #{tpu_custom_call.1} parent=1 // pred_fallthru
      _
    %v26 = vld [vmem:[#allocation2] sm:$0xff]
    %v27 = vld [vmem:[#allocation2 + $0x8] sm:$0xff]
    %v28 = vld [vmem:[#allocation2 + $0x10] sm:$0xff]
    %v29 = vld [vmem:[#allocation2 + $0x18] sm:$0xff]
    %v30 = vld [vmem:[#allocation2 + $0x20] sm:$0xff]
    %v31 = vld [vmem:[#allocation2 + $0x28] sm:$0xff]
    %v32 = vld [vmem:[#allocation2 + $0x30] sm:$0xff]
    %v33 = vld [vmem:[#allocation2 + $0x38] sm:$0xff]
    %v34 = vld [vmem:[%s1] sm:$0x3]
    %v36 = vlaneseq
    %v37 = vshrl.u32 %v36, 7
    %v38 = vsub.s32 0, %v37
    %v39 = vrot.slane %v34, %v38
    %v40 = vlaneseq
    %v41 = vshrl.u32 %v40, 7
    %v42 = vsub.s32 1, %v41
    %v43 = vrot.slane %v34, %v42
    %v46 = vmul.f32 %v26, %v39
    %v47 = vmul.f32 %v27, %v43
    %v48 = vmul.f32 %v28, %v39
    %v49 = vmul.f32 %v29, %v43
    %v50 = vmul.f32 %v30, %v39
    %v51 = vmul.f32 %v31, %v43
    %v52 = vmul.f32 %v32, %v39
    %v53 = vmul.f32 %v33, %v43
    %54 = vst [vmem:[#allocation5] sm:$0xff] %v46
    %55 = vst [vmem:[#allocation5 + $0x8] sm:$0xff] %v47
    %56 = vst [vmem:[#allocation5 + $0x10] sm:$0xff] %v48
    %57 = vst [vmem:[#allocation5 + $0x18] sm:$0xff] %v49
    %58 = vst [vmem:[#allocation5 + $0x20] sm:$0xff] %v50
    %59 = vst [vmem:[#allocation5 + $0x28] sm:$0xff] %v51
    %60 = vst [vmem:[#allocation5 + $0x30] sm:$0xff] %v52
    %61 = vst [vmem:[#allocation5 + $0x38] sm:$0xff] %v53
    // Predicated region
    $region14: #{tpu_custom_call.1} parent=1 // pred_check
      _
    $region15: #{tpu_custom_call.1} parent=1 // pred_check_branch
      %63 = sbr.rel (0) target = $region17
    $region16: #{tpu_custom_call.1} parent=1 // pred_region
      %s65 = ssub.s32 1024, 1024
      %66 = vsyncadd [#allocation4], %s65
      %s67 = sshll.u32 [#allocation5], 4
      %s68 = int_to_ptr.vmem [resolvable:$true] %s67
      %73 = dma.vmem_to_hbm [thread:$0]  %s68, 1024, %s2, [#allocation4], 256, 256, 16
    $region17: #{tpu_custom_call.1} parent=1 // pred_fallthru
      _
    // Predicated region
    $region18: #{tpu_custom_call.1} parent=1 // pred_check
      _
    $region19: #{tpu_custom_call.1} parent=1 // pred_check_branch
      %75 = sbr.rel (0) target = $region21
    $region20: #{tpu_custom_call.1} parent=1 // pred_region
      %76 = dma.done [#allocation4], 1024
    $region21: #{tpu_custom_call.1} parent=1 // pred_fallthru
      _
    %77 = vsyncpa [#allocation3], 1
    %78 = vsyncpa [#allocation4], 1

</llo_original>
